<compile_context>
chip_gen: v6e
topology: v6e:2x2x1
jax: 0.10.0
libtpu: 0.0.40
codegen_flags: <defaults>
</compile_context>

<pallas_src>
import jax
import jax.numpy as jnp
from jax.experimental import pallas as pl
from jax.experimental.pallas import tpu as pltpu


def _round_up(x, m):
    return ((x + m - 1) // m) * m


def _split_dim(dim, tile_max):
    """Pad `dim` to lane alignment and split into equal 128-multiple tiles of
    at most `tile_max`.  Returns (padded_dim, tile, num_tiles)."""
    p = _round_up(dim, 128)
    n = pl.cdiv(p, tile_max)
    t = _round_up(pl.cdiv(p, n), 128)
    return n * t, t, n


def _pick_tm(m, tm_max=1024, sub=16, split_at=512):
    """Rows per M tile.  A full-dim block when M fits in one tile (always a
    legal block shape); on medium/large M split into >=2 sublane-aligned tiles
    so the 'parallel' M axis actually feeds both v7x TensorCores."""
    if m <= sub:
        return m
    if m > tm_max:
        return tm_max                       # multiple of 16 -> >=2 tiles
    if m >= split_at:
        return _round_up(pl.cdiv(m, 2), sub)
    return m


def _vmem_limit_bytes():
    """Half of physical VMEM (64 MiB on v5e/v6e, 32 MiB on v7x), clamped."""
    try:
        cap = pltpu.get_tpu_info().vmem_capacity_bytes
    except Exception:
        cap = 64 * 1024 * 1024
    return int(min(max(cap // 2, 32 * 1024 * 1024), 96 * 1024 * 1024))


def _linear_kernel_acc(x_ref, w_ref, b_ref, o_ref, acc_ref):
    # grid = (M tiles, N tiles, K tiles); K is the innermost reduction axis.
    # x: (TM, TK)  w: (TK, TN)  b: (1, TN)  o: (TM, TN)  acc: (TM, TN) f32
    @pl.when(pl.program_id(2) == 0)
    def _init():
        # Fold the bias into the accumulator init (saves a finalize VPU pass).
        acc_ref[...] = jnp.broadcast_to(
            b_ref[...].astype(jnp.float32), acc_ref.shape)

    acc_ref[...] += jnp.dot(
        x_ref[...].astype(w_ref.dtype), w_ref[...],
        preferred_element_type=jnp.float32)

    @pl.when(pl.program_id(2) == pl.num_programs(2) - 1)
    def _store():
        o_ref[...] = acc_ref[...].astype(o_ref.dtype)


def _linear_kernel_single_k(x_ref, w_ref, b_ref, o_ref):
    # Whole K fits in one tile: accumulate inside the dot, no scratch needed.
    acc = jnp.dot(x_ref[...].astype(w_ref.dtype), w_ref[...],
                  preferred_element_type=jnp.float32)
    o_ref[...] = (acc + b_ref[...].astype(jnp.float32)).astype(o_ref.dtype)


def prepare_linear_params(w_t, bias, *, compute_dtype=jnp.bfloat16,
                          tn_max=512, tk_max=512):
    """One-time setup: pad/cast the (H_in, H_out) weight and the bias to
    lane-dense, tile-aligned shapes (hoisted out of the per-call path)."""
    h_in, h_out = w_t.shape
    kp, tk, grid_k = _split_dim(h_in, tk_max)
    np_, tn, grid_n = _split_dim(h_out, tn_max)

    w_p = jnp.zeros((kp, np_), dtype=compute_dtype)
    w_p = w_p.at[:h_in, :h_out].set(w_t.astype(compute_dtype))
    b_p = jnp.zeros((1, np_), dtype=jnp.float32)
    b_p = b_p.at[0, :h_out].set(bias.astype(jnp.float32))

    return dict(w_p=w_p, b_p=b_p, h_in=h_in, h_out=h_out,
                kp=kp, tk=tk, grid_k=grid_k,
                np=np_, tn=tn, grid_n=grid_n,
                compute_dtype=jnp.dtype(compute_dtype))


def pallas_linear(x2d, params, *, tm_max=1024):
    """y = x2d @ W + b with W/b pre-padded by prepare_linear_params."""
    m, h_in = x2d.shape
    assert h_in == params["h_in"], "hidden-size mismatch"
    kp, tk, grid_k = params["kp"], params["tk"], params["grid_k"]
    np_, tn, grid_n = params["np"], params["tn"], params["grid_n"]
    w_p, b_p, h_out = params["w_p"], params["b_p"], params["h_out"]
    cdt = params["compute_dtype"]
    out_dtype = x2d.dtype

    # K padding must be zero-filled (it feeds the reduction), so pad x along K
    # only when H_in is not already tile-aligned; cast to the MXU compute dtype
    # while copying anyway (halves the kernel's activation DMA).  M is never
    # padded: grid_m = cdiv and Pallas masks the ragged last M tile.
    if h_in != kp:
        x_in = (jnp.zeros((m, kp), dtype=cdt)
                .at[:, :h_in].set(x2d.astype(cdt)))
    elif grid_n >= 3 and x2d.dtype.itemsize > cdt.itemsize:
        # x is re-streamed once per N tile; narrowing first is cheaper then.
        x_in = x2d.astype(cdt)
    else:
        x_in = x2d  # no copy; tiles are cast to the compute dtype in-kernel

    tm = _pick_tm(m, tm_max=tm_max)
    grid_m = pl.cdiv(m, tm)
    grid = (grid_m, grid_n, grid_k)

    kernel = _linear_kernel_acc if grid_k > 1 else _linear_kernel_single_k
    scratch = [pltpu.VMEM((tm, tn), jnp.float32)] if grid_k > 1 else []

    x_item = jnp.dtype(x_in.dtype).itemsize
    w_item = jnp.dtype(w_p.dtype).itemsize
    o_item = jnp.dtype(out_dtype).itemsize
    cost = pl.CostEstimate(
        flops=2 * grid_m * tm * kp * np_,
        transcendentals=0,
        bytes_accessed=(grid_n * grid_m * tm * kp * x_item   # x per N tile
                        + grid_m * kp * np_ * w_item         # W per M tile
                        + grid_m * tm * np_ * o_item),
    )

    out_p = pl.pallas_call(
        kernel,
        out_shape=jax.ShapeDtypeStruct((m, np_), out_dtype),
        grid_spec=pltpu.PrefetchScalarGridSpec(
            num_scalar_prefetch=0,
            grid=grid,
            in_specs=[
                pl.BlockSpec((tm, tk), lambda i, j, k: (i, k)),  # x tiles
                pl.BlockSpec((tk, tn), lambda i, j, k: (k, j)),  # weight tiles
                pl.BlockSpec((1, tn), lambda i, j, k: (0, j)),   # bias row
            ],
            out_specs=pl.BlockSpec((tm, tn), lambda i, j, k: (i, j)),
            scratch_shapes=scratch,
        ),
        compiler_params=pltpu.CompilerParams(
            dimension_semantics=("parallel", "parallel", "arbitrary"),
            vmem_limit_bytes=_vmem_limit_bytes(),
        ),
        cost_estimate=cost,
    )(x_in, w_p, b_p)

    return out_p if np_ == h_out else out_p[:, :h_out]


def multi_input_wrapper(x_seq, params):
    """Pallas equivalent of MultiInputWrapper.forward:
         (x0, *z) -> (layer(x0), *z)
    Only x0 enters the kernel; pass-through tensors cost nothing."""
    # TODO(synk): the spec's `layer` is arbitrary; only the Linear(H, H) hot
    # path is implemented as a Pallas kernel here.
    x0, z = x_seq[0], x_seq[1:]
    b, s, h = x0.shape
    y2d = pallas_linear(x0.reshape(b * s, h), params)
    return (y2d.reshape(b, s, params["h_out"]), *z)


if __name__ == "__main__":
    B, S, H = 2, 8, 32

    key = jax.random.PRNGKey(0)
    kx, kz1, kz2, kw, kb = jax.random.split(key, 5)

    # Multi-input tuple: first element goes through the layer, the rest pass
    # through unchanged.
    x0 = jax.random.normal(kx, (B, S, H), dtype=jnp.float32)
    z1 = jax.random.normal(kz1, (B, S), dtype=jnp.float32)
    z2 = jax.random.normal(kz2, (B, 4, 4), dtype=jnp.float32)
    x_seq = (x0, z1, z2)

    # Synthetic Linear(H, H).  PyTorch stores weight as (out, in); the kernel
    # takes the transposed (in, out) layout, padded/cast once at setup.
    w = jax.random.normal(kw, (H, H), dtype=jnp.float32) * 0.05
    bias = jax.random.normal(kb, (H,), dtype=jnp.float32) * 0.05
    params = prepare_linear_params(w.T, bias)   # bf16 MXU inputs, f32 accum

    out = multi_input_wrapper(x_seq, params)
    out = jax.block_until_ready(out)

    # Correctness check against a plain-JAX f32 reference (loose tolerance
    # because the kernel feeds the MXU bf16 inputs with f32 accumulation).
    y_ref = (x0.reshape(B * S, H) @ w.T + bias).reshape(B, S, H)
    assert out[0].shape == (B, S, H)
    assert out[0].dtype == x0.dtype
    assert jnp.allclose(out[0], y_ref, atol=2e-2, rtol=2e-2)
    assert jnp.array_equal(out[1], z1)
    assert jnp.array_equal(out[2], z2)

    print("KERNEL_OK")
</pallas_src>

<mosaic_0001>
module attributes {stable_mosaic.version = 11 : i64} {
  func.func @_linear_kernel_single_k(%arg0: i32, %arg1: i32, %arg2: i32, %arg3: memref<16x128xbf16, #tpu.memory_space<vmem>>, %arg4: memref<128x128xbf16, #tpu.memory_space<vmem>>, %arg5: memref<1x128xf32, #tpu.memory_space<vmem>>, %arg6: memref<16x128xf32, #tpu.memory_space<vmem>>) attributes {dimension_semantics = [#tpu.dimension_semantics<parallel>, #tpu.dimension_semantics<parallel>, #tpu.dimension_semantics<arbitrary>], iteration_bounds = array<i64: 1, 1, 1>, scalar_prefetch = 0 : i64, scratch_operands = 0 : i64, tpu.core_type = #tpu.core_type<tc>, window_params = [{transform_indices = @transform_0, window_bounds = array<i64: 16, 128>}, {transform_indices = @transform_1, window_bounds = array<i64: 128, 128>}, {transform_indices = @transform_2, window_bounds = array<i64: 1, 128>}, {transform_indices = @transform_3, window_bounds = array<i64: 16, 128>}]} {
    %c0 = arith.constant 0 : index
    %c0_0 = arith.constant 0 : index
    %0 = vector.load %arg3[%c0, %c0_0] : memref<16x128xbf16, #tpu.memory_space<vmem>>, vector<16x128xbf16>
    %c0_1 = arith.constant 0 : index
    %c0_2 = arith.constant 0 : index
    %1 = vector.load %arg4[%c0_1, %c0_2] : memref<128x128xbf16, #tpu.memory_space<vmem>>, vector<128x128xbf16>
    %cst = arith.constant dense<0.000000e+00> : vector<16x128xf32>
    %2 = tpu.matmul %0, %1, %cst {dimension_numbers = #tpu.dot_dimension_numbers<[1], [0], [0], [1], [0, 0, 1, 1], [], []>} : vector<16x128xbf16>, vector<128x128xbf16>, vector<16x128xf32> -> vector<16x128xf32>
    %c0_3 = arith.constant 0 : index
    %c0_4 = arith.constant 0 : index
    %3 = vector.load %arg5[%c0_3, %c0_4] : memref<1x128xf32, #tpu.memory_space<vmem>>, vector<1x128xf32>
    %4 = vector.broadcast %3 : vector<1x128xf32> to vector<16x128xf32>
    %5 = arith.addf %2, %4 : vector<16x128xf32>
    %c0_5 = arith.constant 0 : index
    %c0_6 = arith.constant 0 : index
    %6 = vector.load %arg6[%c0_5, %c0_6] : memref<16x128xf32, #tpu.memory_space<vmem>>, vector<16x128xf32>
    tpu.vector_store %arg6[%c0_5, %c0_6], %5 {strides = array<i32>} : memref<16x128xf32, #tpu.memory_space<vmem>>, vector<16x128xf32>,
    return
  }
  func.func @transform_0(%arg0: i32, %arg1: i32, %arg2: i32) -> (i32, i32) {
    %c0_i32 = arith.constant 0 : i32
    return %arg0, %arg2 : i32, i32
  }
  func.func @transform_1(%arg0: i32, %arg1: i32, %arg2: i32) -> (i32, i32) {
    %c0_i32 = arith.constant 0 : i32
    return %arg2, %arg1 : i32, i32
  }
  func.func @transform_2(%arg0: i32, %arg1: i32, %arg2: i32) -> (i32, i32) {
    %c0_i32 = arith.constant 0 : i32
    %c0_i32_0 = arith.constant 0 : i32
    return %c0_i32, %arg1 : i32, i32
  }
  func.func @transform_3(%arg0: i32, %arg1: i32, %arg2: i32) -> (i32, i32) {
    %c0_i32 = arith.constant 0 : i32
    return %arg0, %arg1 : i32, i32
  }
}

</mosaic_0001>

<llo_original>
// kernel: tpu_custom_call.1
$region0: #{tpu_custom_call.1}
  #allocation0 [shape = 'u32[]', space=smem, size = 0x4, offset = 0x4, fixed_abs, tag = 'smem constant byte address 0x4 - core index']
  #allocation1 [shape = 'u32[144,128]{1,0:T(1,128)}', space=vmem, size = 0x12000, scoped, tag = 'internal scratch']
  %s0 = inlined_call_operand.hbm [shape: bf16[16,128], index: 0, kind: input, shape index: {}]
  %s1 = inlined_call_operand.hbm [shape: bf16[128,128], index: 1, kind: input, shape index: {}]
  %s2 = inlined_call_operand.vmem [shape: f32[1,128], index: 2, kind: input, shape index: {}]
  %s3 = inlined_call_operand.hbm [shape: f32[16,128], index: 3, kind: output, shape index: {}]
  %s4 = sld [smem:[#allocation0]]
  $region30: #{tpu_custom_call.1} parent=0
    _
  %s6 = ssub.s32 1, %s4
  %s7 = scalar_select 0, %s6, %s4
  $region1: #{tpu_custom_call.1} parent=0
    #allocation2 [shape = 'u8[4096]{0}', space=vmem, size = 0x1000, scoped, tag = 'input window, operand 0, single buffered']
    #allocation3 [shape = 's32[1]{0}', space=sflag, size = 0x4, scoped, tag = 'scoped memory for tpu_custom_call.1']
    #allocation4 [shape = 's32[1]{0}', space=sflag, size = 0x4, scoped, tag = 'scoped memory for tpu_custom_call.1']
    #allocation5 [shape = 'u8[32768]{0}', space=vmem, size = 0x8000, scoped, tag = 'input window, operand 1, single buffered']
    #allocation6 [shape = 's32[1]{0}', space=sflag, size = 0x4, scoped, tag = 'scoped memory for tpu_custom_call.1']
    #allocation7 [shape = 'u8[8192]{0}', space=vmem, size = 0x2000, scoped, tag = 'output window, operand 0, single buffered']
    %8 = vsyncpa [#allocation3], 0
    %9 = vsyncpa [#allocation6], 0
    %10 = vsyncpa [#allocation4], 0
    // Predicated region
    $region2: #{tpu_custom_call.1} parent=1 // pred_check
      _
    $region3: #{tpu_custom_call.1} parent=1 // pred_check_branch
      %12 = sbr.rel (0) target = $region5
    $region4: #{tpu_custom_call.1} parent=1 // pred_region
      %s14 = ssub.s32 128, 128
      %15 = vsyncadd [#allocation3], %s14
      %s16 = sshll.u32 [#allocation2], 4
      %s17 = int_to_ptr.vmem [resolvable:$true] %s16
      %22 = dma.hbm_to_vmem [thread:$0]  %s0, 128, %s17, [#allocation3], 64, 64, 4
    $region5: #{tpu_custom_call.1} parent=1 // pred_fallthru
      _
    // Predicated region
    $region6: #{tpu_custom_call.1} parent=1 // pred_check
      _
    $region7: #{tpu_custom_call.1} parent=1 // pred_check_branch
      %24 = sbr.rel (0) target = $region9
    $region8: #{tpu_custom_call.1} parent=1 // pred_region
      %s26 = ssub.s32 1024, 1024
      %27 = vsyncadd [#allocation6], %s26
      %s28 = sshll.u32 [#allocation5], 4
      %s29 = int_to_ptr.vmem [resolvable:$true] %s28
      %34 = dma.hbm_to_vmem [thread:$0]  %s1, 1024, %s29, [#allocation6], 64, 64, 4
    $region9: #{tpu_custom_call.1} parent=1 // pred_fallthru
      _
    // Predicated region
    $region10: #{tpu_custom_call.1} parent=1 // pred_check
      _
    $region11: #{tpu_custom_call.1} parent=1 // pred_check_branch
      %36 = sbr.rel (0) target = $region13
    $region12: #{tpu_custom_call.1} parent=1 // pred_region
      _
    $region13: #{tpu_custom_call.1} parent=1 // pred_fallthru
      _
    // Predicated region
    $region14: #{tpu_custom_call.1} parent=1 // pred_check
      _
    $region15: #{tpu_custom_call.1} parent=1 // pred_check_branch
      %38 = sbr.rel (0) target = $region17
    $region16: #{tpu_custom_call.1} parent=1 // pred_region
      %39 = dma.done [#allocation3], 128
    $region17: #{tpu_custom_call.1} parent=1 // pred_fallthru
      _
    // Predicated region
    $region18: #{tpu_custom_call.1} parent=1 // pred_check
      _
    $region19: #{tpu_custom_call.1} parent=1 // pred_check_branch
      %41 = sbr.rel (0) target = $region21
    $region20: #{tpu_custom_call.1} parent=1 // pred_region
      %42 = dma.done [#allocation6], 1024
    $region21: #{tpu_custom_call.1} parent=1 // pred_fallthru
      _
    %v44 = vld [vmem:[#allocation2] sm:$0xf]
    %v45 = vld [vmem:[#allocation2 + $0x4] sm:$0xf]
    %v46 = vld [vmem:[#allocation5] sm:$0xf]
    %v47 = vld [vmem:[#allocation5 + $0x4] sm:$0xf]
    %v48 = vld [vmem:[#allocation5 + $0x8] sm:$0xf]
    %v49 = vld [vmem:[#allocation5 + $0xc] sm:$0xf]
    %v50 = vld [vmem:[#allocation5 + $0x10] sm:$0xf]
    %v51 = vld [vmem:[#allocation5 + $0x14] sm:$0xf]
    %v52 = vld [vmem:[#allocation5 + $0x18] sm:$0xf]
    %v53 = vld [vmem:[#allocation5 + $0x1c] sm:$0xf]
    %v54 = vld [vmem:[#allocation5 + $0x20] sm:$0xf]
    %v55 = vld [vmem:[#allocation5 + $0x24] sm:$0xf]
    %v56 = vld [vmem:[#allocation5 + $0x28] sm:$0xf]
    %v57 = vld [vmem:[#allocation5 + $0x2c] sm:$0xf]
    %v58 = vld [vmem:[#allocation5 + $0x30] sm:$0xf]
    %v59 = vld [vmem:[#allocation5 + $0x34] sm:$0xf]
    %v60 = vld [vmem:[#allocation5 + $0x38] sm:$0xf]
    %v61 = vld [vmem:[#allocation5 + $0x3c] sm:$0xf]
    %v62 = vld [vmem:[%s2] sm:$0x1]
    %v64 = vlaneseq
    %v65 = vshrl.u32 %v64, 7
    %v66 = vsub.s32 0, %v65
    %v67 = vrot.slane %v62, %v66
    %v71 = vunpack.c.l.b16 %v44
    %v72 = vunpack.c.l.b16 %v45
    %v73 = vpack.c.b16 %v72, %v71
    %v91 = vunpack.c.l.b16 %v46
    %v92 = vunpack.c.l.b16 %v47
    %v93 = vunpack.c.l.b16 %v48
    %v94 = vunpack.c.l.b16 %v49
    %v95 = vunpack.c.l.b16 %v50
    %v96 = vunpack.c.l.b16 %v51
    %v97 = vunpack.c.l.b16 %v52
    %v98 = vunpack.c.l.b16 %v53
    %v99 = vunpack.c.l.b16 %v54
    %v100 = vunpack.c.l.b16 %v55
    %v101 = vunpack.c.l.b16 %v56
    %v102 = vunpack.c.l.b16 %v57
    %v103 = vunpack.c.l.b16 %v58
    %v104 = vunpack.c.l.b16 %v59
    %v105 = vunpack.c.l.b16 %v60
    %v106 = vunpack.c.l.b16 %v61
    %v107 = vpack.c.b16 %v92, %v91
    %v108 = vpack.c.b16 %v94, %v93
    %v109 = vpack.c.b16 %v96, %v95
    %v110 = vpack.c.b16 %v98, %v97
    %v111 = vpack.c.b16 %v100, %v99
    %v112 = vpack.c.b16 %v102, %v101
    %v113 = vpack.c.b16 %v104, %v103
    %v114 = vpack.c.b16 %v106, %v105
    %123 = vmatprep.subr.bf16.mxu0 0
    %124 = vmatpush1.bf16.msra.mxu0 %v114
    %125 = vmatprep.subr.bf16.mxu0 0
    %126 = vmatpush1.bf16.msra.mxu0 %v113
    %127 = vmatprep.subr.bf16.mxu0 0
    %128 = vmatpush1.bf16.msra.mxu0 %v112
    %129 = vmatprep.subr.bf16.mxu0 0
    %130 = vmatpush1.bf16.msra.mxu0 %v111
    %131 = vmatprep.subr.bf16.mxu0 0
    %132 = vmatpush1.bf16.msra.mxu0 %v110
    %133 = vmatprep.subr.bf16.mxu0 0
    %134 = vmatpush1.bf16.msra.mxu0 %v109
    %135 = vmatprep.subr.bf16.mxu0 0
    %136 = vmatpush1.bf16.msra.mxu0 %v108
    %137 = vmatprep.subr.bf16.mxu0 0
    %138 = vmatpush1.bf16.msra.mxu0 %v107
    %139 = vmatprep.subr.bf16.mxu0 0
    %140 = vmatpush2.bf16.msra.mxu0 0
    %141 = vmatprep.subr.bf16.mxu0 0
    %142 = vmatpush2.bf16.msra.mxu0 0
    %143 = vmatprep.subr.bf16.mxu0 0
    %144 = vmatpush2.bf16.msra.mxu0 0
    %145 = vmatprep.subr.bf16.mxu0 0
    %146 = vmatpush2.bf16.msra.mxu0 0
    %147 = vmatprep.subr.bf16.mxu0 0
    %148 = vmatpush2.bf16.msra.mxu0 0
    %149 = vmatprep.subr.bf16.mxu0 0
    %150 = vmatpush2.bf16.msra.mxu0 0
    %151 = vmatprep.subr.bf16.mxu0 0
    %152 = vmatpush2.bf16.msra.mxu0 0
    %153 = vmatprep.subr.bf16.mxu0 0
    %154 = vmatpush2.bf16.msra.mxu0 0
    %155 = vmatprep.mubr.bf16.mxu0 0
    %156 = vmatmul.mubr.bf16.gmra.mxu0 %v73
    %v157 = vpop.f32.mrf.mxu0
    %v158 = vadd.f32 %v67, %v157
    %v159 = vpop.f32.mrf.mxu0
    %v160 = vpop.f32.mrf.mxu0
    %v161 = vadd.f32 %v67, %v160
    %v162 = vpop.f32.mrf.mxu0
    %163 = vdwg.mxu0
    %164 = vst [vmem:[#allocation7] sm:$0xff] %v158
    %165 = vst [vmem:[#allocation7 + $0x8] sm:$0xff] %v161
    // Predicated region
    $region22: #{tpu_custom_call.1} parent=1 // pred_check
      _
    $region23: #{tpu_custom_call.1} parent=1 // pred_check_branch
      %167 = sbr.rel (0) target = $region25
    $region24: #{tpu_custom_call.1} parent=1 // pred_region
      %s169 = ssub.s32 256, 256
      %170 = vsyncadd [#allocation4], %s169
      %s171 = sshll.u32 [#allocation7], 4
      %s172 = int_to_ptr.vmem [resolvable:$true] %s171
      %177 = dma.vmem_to_hbm [thread:$0]  %s172, 256, %s3, [#allocation4], 128, 128, 8
    $region25: #{tpu_custom_call.1} parent=1 // pred_fallthru
      _
    // Predicated region
    $region26: #{tpu_custom_call.1} parent=1 // pred_check
      _
    $region27: #{tpu_custom_call.1} parent=1 // pred_check_branch
      %179 = sbr.rel (0) target = $region29
    $region28: #{tpu_custom_call.1} parent=1 // pred_region
      %180 = dma.done [#allocation4], 256
    $region29: #{tpu_custom_call.1} parent=1 // pred_fallthru
      _
    %181 = vsyncpa [#allocation3], 1
    %182 = vsyncpa [#allocation6], 1
    %183 = vsyncpa [#allocation4], 1

</llo_original>
